<compile_context>
chip_gen: v7x
topology: tpu7x:2x2x1
jax: 0.10.0
libtpu: 0.0.40
codegen_flags: <defaults>
</compile_context>

<pallas_src>
import functools

import jax
import jax.numpy as jnp
import numpy as np
from jax.experimental import pallas as pl
from jax.experimental.pallas import tpu as pltpu


def _round_up8(n):
    return ((n + 7) // 8) * 8


def _rnn_encoder_kernel(x_ref, p_ref, out_ref, *, T, I, H, O, offs):
    """Single-invocation RNN encoder.

    x_ref : (T, I)      full input sequence (batch=1 squeezed out)
    p_ref : (rows, H)   packed parameter slab (see prepare_params)
    out_ref: (1, O)     fc(output[-1])
    """
    off_wih, off_b, off_whh, off_whht, off_wfc, off_bfc = offs

    wih = p_ref[off_wih:off_wih + I, :]           # (I, H)  W_ih^T
    b = p_ref[off_b:off_b + 1, :]                 # (1, H)  b_ih + b_hh
    whh = p_ref[off_whh:off_whh + H, :]           # (H, H)  W_hh
    whht = p_ref[off_whht:off_whht + H, :]        # (H, H)  W_hh^T
    wfc = p_ref[off_wfc:off_wfc + H, 0:O]         # (H, O)  W_fc^T
    bfc = p_ref[off_bfc:off_bfc + 1, 0:O]         # (1, O)  b_fc

    # Hoisted input projection: one M=T MXU matmul covers every timestep
    # (off the per-step critical chain); one transpose yields the per-step
    # column view used by the even steps.
    xw_row = jnp.dot(x_ref[...], wih,
                     preferred_element_type=jnp.float32) + b        # (T, H)
    xw_col = jnp.transpose(xw_row)                                   # (H, T)

    # Serial recurrence on VPU/XLU only.  h alternates between a (1,H) row
    # and an (H,1) column so the broadcast-multiply + reduce of each step
    # lands already in the orientation the next step needs — no per-step
    # transpose and no MXU round trip on the latency-bound chain.
    # T is static & tiny -> statically unrolled; h lives in vregs.
    # TODO(synk): if T grows past a few dozen, switch to lax.fori_loop with
    # xw staged in VMEM scratch to bound code size / vreg pressure.
    h_row = jnp.zeros((1, H), jnp.float32)
    h_col = jnp.zeros((H, 1), jnp.float32)
    for t in range(T):
        if t % 2 == 0:
            # row -> column:  acc[j] = sum_k W_hh[j, k] * h[k]
            acc = jnp.sum(whh * h_row, axis=1, keepdims=True)       # (H, 1)
            h_col = jnp.tanh(xw_col[:, t:t + 1] + acc)
        else:
            # column -> row:  acc[j] = sum_k W_hh^T[k, j] * h[k]
            acc = jnp.sum(whht * h_col, axis=0, keepdims=True)      # (1, H)
            h_row = jnp.tanh(xw_row[t:t + 1, :] + acc)
    h_last = h_row if T % 2 == 0 else jnp.transpose(h_col)          # (1, H)

    # Final projection: one tiny MXU matmul after the loop.
    out_ref[...] = (jnp.dot(h_last, wfc, preferred_element_type=jnp.float32)
                    + bfc).astype(out_ref.dtype)


def prepare_params(w_ih, w_hh, b_ih, b_hh, w_fc, b_fc):
    """One-time packing of all weights/biases into a single VMEM slab.

    Layout (all row offsets 8-aligned, column width H):
      [0 , I )    W_ih^T
      [I , I+1)   b_ih + b_hh
      [a , a+H)   W_hh
      [b , b+H)   W_hh^T
      [c , c+H)   W_fc^T  (in columns [0, O))
      [d , d+1)   b_fc    (in columns [0, O))
    """
    H, I = w_ih.shape
    O = w_fc.shape[0]
    assert H % 8 == 0, "hidden_size must be a multiple of 8 for this packing"
    assert O <= H, "output_size must fit inside the H-wide parameter slab"

    off_wih = 0
    off_b = I
    off_whh = _round_up8(I + 1)
    off_whht = off_whh + H
    off_wfc = off_whht + H
    off_bfc = off_wfc + H
    rows = _round_up8(off_bfc + 1)

    p = np.zeros((rows, H), np.float32)
    p[off_wih:off_wih + I, :] = np.asarray(w_ih, np.float32).T
    p[off_b, :] = np.asarray(b_ih, np.float32) + np.asarray(b_hh, np.float32)
    p[off_whh:off_whh + H, :] = np.asarray(w_hh, np.float32)
    p[off_whht:off_whht + H, :] = np.asarray(w_hh, np.float32).T
    p[off_wfc:off_wfc + H, :O] = np.asarray(w_fc, np.float32).T
    p[off_bfc, :O] = np.asarray(b_fc, np.float32)

    offs = (off_wih, off_b, off_whh, off_whht, off_wfc, off_bfc)
    return jnp.asarray(p), offs, (I, H, O)


def navie_rnn_encoder_apply(x, packed_params):
    """x: (T, 1, I) float32 (PyTorch (seq, batch, feature)).  Returns (1, O)."""
    p, offs, (I, H, O) = packed_params
    T, B, I_x = x.shape
    # TODO(synk): batch > 1 (and filling the 2nd TensorCore on v7x) would need
    # the hidden state carried as (B, H); the module's init_hidden() hard-codes
    # batch=1, so the faithful single-sequence form is kept here.
    assert B == 1 and I_x == I and T >= 1

    x2d = jnp.asarray(x, jnp.float32).reshape(T, I)    # drop batch=1 dim
    vmem = pl.BlockSpec(memory_space=pltpu.MemorySpace.VMEM)
    kernel = functools.partial(_rnn_encoder_kernel,
                               T=T, I=I, H=H, O=O, offs=offs)

    flops = 2 * T * I * H + 2 * T * H * H + 2 * H * O
    bytes_accessed = 4 * (T * I + p.shape[0] * H + O)

    return pl.pallas_call(
        kernel,
        out_shape=jax.ShapeDtypeStruct((1, O), jnp.float32),
        in_specs=[vmem, vmem],
        out_specs=vmem,
        cost_estimate=pl.CostEstimate(flops=flops,
                                      transcendentals=T * H,
                                      bytes_accessed=bytes_accessed),
    )(x2d, p)


def _reference(x, w_ih, w_hh, b_ih, b_hh, w_fc, b_fc):
    """Pure-JAX reference mirroring torch.nn.RNN(tanh) + Linear."""
    hp = jax.lax.Precision.HIGHEST
    T, B, _ = x.shape
    H = w_ih.shape[0]
    h = jnp.zeros((B, H), jnp.float32)
    for t in range(T):
        h = jnp.tanh(jnp.dot(x[t], w_ih.T, precision=hp) + b_ih
                     + jnp.dot(h, w_hh.T, precision=hp) + b_hh)
    return jnp.dot(h, w_fc.T, precision=hp) + b_fc


if __name__ == "__main__":
    # Small shapes consistent with the module: seq=8, batch=1 (forced by
    # init_hidden), input_size=16, hidden_size=32, output_size=8.
    T, I, H, O = 8, 16, 32, 8

    key = jax.random.PRNGKey(0)
    kx, k1, k2, k3, k4, k5, k6 = jax.random.split(key, 7)

    # Deterministic param init mimicking PyTorch's U(-1/sqrt(H), 1/sqrt(H)).
    s = 1.0 / np.sqrt(H)
    w_ih = jax.random.uniform(k1, (H, I), jnp.float32, -s, s)
    w_hh = jax.random.uniform(k2, (H, H), jnp.float32, -s, s)
    b_ih = jax.random.uniform(k3, (H,), jnp.float32, -s, s)
    b_hh = jax.random.uniform(k4, (H,), jnp.float32, -s, s)
    w_fc = jax.random.uniform(k5, (O, H), jnp.float32, -s, s)
    b_fc = jax.random.uniform(k6, (O,), jnp.float32, -s, s)

    x = jax.random.normal(kx, (T, 1, I), jnp.float32)

    # One-time weight preprocessing, off the per-call path.
    packed = prepare_params(w_ih, w_hh, b_ih, b_hh, w_fc, b_fc)

    out = navie_rnn_encoder_apply(x, packed)
    out = jax.block_until_ready(out)

    ref = _reference(x, w_ih, w_hh, b_ih, b_hh, w_fc, b_fc)
    np.testing.assert_allclose(np.asarray(out), np.asarray(ref),
                               rtol=2e-5, atol=2e-5)
    assert out.shape == (1, O)
    print("KERNEL_OK")
</pallas_src>

<mosaic_0001>
module attributes {stable_mosaic.version = 11 : i64} {
  func.func @_rnn_encoder_kernel(%arg0: memref<8x16xf32, #tpu.memory_space<vmem>>, %arg1: memref<128x32xf32, #tpu.memory_space<vmem>>, %arg2: memref<1x8xf32, #tpu.memory_space<vmem>>) attributes {dimension_semantics = [], scalar_prefetch = 0 : i64, scratch_operands = 0 : i64, tpu.core_type = #tpu.core_type<tc>} {
    %c0 = arith.constant 0 : index
    %c0_0 = arith.constant 0 : index
    %0 = vector.load %arg1[%c0, %c0_0] : memref<128x32xf32, #tpu.memory_space<vmem>>, vector<16x32xf32>
    %c16 = arith.constant 16 : index
    %c0_1 = arith.constant 0 : index
    %1 = vector.load %arg1[%c16, %c0_1] : memref<128x32xf32, #tpu.memory_space<vmem>>, vector<1x32xf32>
    %c24 = arith.constant 24 : index
    %c0_2 = arith.constant 0 : index
    %2 = vector.load %arg1[%c24, %c0_2] : memref<128x32xf32, #tpu.memory_space<vmem>>, vector<32x32xf32>
    %c56 = arith.constant 56 : index
    %c0_3 = arith.constant 0 : index
    %3 = vector.load %arg1[%c56, %c0_3] : memref<128x32xf32, #tpu.memory_space<vmem>>, vector<32x32xf32>
    %c88 = arith.constant 88 : index
    %c0_4 = arith.constant 0 : index
    %4 = vector.load %arg1[%c88, %c0_4] : memref<128x32xf32, #tpu.memory_space<vmem>>, vector<32x8xf32>
    %c120 = arith.constant 120 : index
    %c0_5 = arith.constant 0 : index
    %5 = vector.load %arg1[%c120, %c0_5] : memref<128x32xf32, #tpu.memory_space<vmem>>, vector<1x8xf32>
    %c0_6 = arith.constant 0 : index
    %c0_7 = arith.constant 0 : index
    %6 = vector.load %arg0[%c0_6, %c0_7] : memref<8x16xf32, #tpu.memory_space<vmem>>, vector<8x16xf32>
    %cst = arith.constant dense<0.000000e+00> : vector<8x32xf32>
    %7 = tpu.matmul %6, %0, %cst {dimension_numbers = #tpu.dot_dimension_numbers<[1], [0], [0], [1], [0, 0, 1, 1], [], []>} : vector<8x16xf32>, vector<16x32xf32>, vector<8x32xf32> -> vector<8x32xf32>
    %8 = vector.broadcast %1 : vector<1x32xf32> to vector<8x32xf32>
    %9 = arith.addf %7, %8 : vector<8x32xf32>
    %10 = tpu.transpose %9, [1, 0] : vector<8x32xf32> -> vector<32x8xf32>
    %cst_8 = arith.constant 0.000000e+00 : f32
    %11 = vector.broadcast %cst_8 : f32 to vector<1x32xf32>
    %12 = vector.broadcast %11 : vector<1x32xf32> to vector<32x32xf32>
    %13 = arith.mulf %2, %12 : vector<32x32xf32>
    %cst_9 = arith.constant dense<0.000000e+00> : vector<32xf32>
    %14 = vector.multi_reduction <add>, %13, %cst_9 [1] : vector<32x32xf32> to vector<32xf32>
    %15 = vector.shape_cast %14 : vector<32xf32> to vector<32x1xf32>
    %16 = vector.extract_strided_slice %10 {offsets = [0, 0], sizes = [32, 1], strides = [1, 1]} : vector<32x8xf32> to vector<32x1xf32>
    %17 = arith.addf %16, %15 : vector<32x1xf32>
    %18 = math.tanh %17 : vector<32x1xf32>
    %19 = vector.broadcast %18 : vector<32x1xf32> to vector<32x32xf32>
    %20 = arith.mulf %3, %19 : vector<32x32xf32>
    %cst_10 = arith.constant dense<0.000000e+00> : vector<32xf32>
    %21 = vector.multi_reduction <add>, %20, %cst_10 [0] : vector<32x32xf32> to vector<32xf32>
    %22 = vector.shape_cast %21 : vector<32xf32> to vector<1x32xf32>
    %23 = vector.extract_strided_slice %9 {offsets = [1, 0], sizes = [1, 32], strides = [1, 1]} : vector<8x32xf32> to vector<1x32xf32>
    %24 = arith.addf %23, %22 : vector<1x32xf32>
    %25 = math.tanh %24 : vector<1x32xf32>
    %26 = vector.broadcast %25 : vector<1x32xf32> to vector<32x32xf32>
    %27 = arith.mulf %2, %26 : vector<32x32xf32>
    %cst_11 = arith.constant dense<0.000000e+00> : vector<32xf32>
    %28 = vector.multi_reduction <add>, %27, %cst_11 [1] : vector<32x32xf32> to vector<32xf32>
    %29 = vector.shape_cast %28 : vector<32xf32> to vector<32x1xf32>
    %30 = vector.extract_strided_slice %10 {offsets = [0, 2], sizes = [32, 1], strides = [1, 1]} : vector<32x8xf32> to vector<32x1xf32>
    %31 = arith.addf %30, %29 : vector<32x1xf32>
    %32 = math.tanh %31 : vector<32x1xf32>
    %33 = vector.broadcast %32 : vector<32x1xf32> to vector<32x32xf32>
    %34 = arith.mulf %3, %33 : vector<32x32xf32>
    %cst_12 = arith.constant dense<0.000000e+00> : vector<32xf32>
    %35 = vector.multi_reduction <add>, %34, %cst_12 [0] : vector<32x32xf32> to vector<32xf32>
    %36 = vector.shape_cast %35 : vector<32xf32> to vector<1x32xf32>
    %37 = vector.extract_strided_slice %9 {offsets = [3, 0], sizes = [1, 32], strides = [1, 1]} : vector<8x32xf32> to vector<1x32xf32>
    %38 = arith.addf %37, %36 : vector<1x32xf32>
    %39 = math.tanh %38 : vector<1x32xf32>
    %40 = vector.broadcast %39 : vector<1x32xf32> to vector<32x32xf32>
    %41 = arith.mulf %2, %40 : vector<32x32xf32>
    %cst_13 = arith.constant dense<0.000000e+00> : vector<32xf32>
    %42 = vector.multi_reduction <add>, %41, %cst_13 [1] : vector<32x32xf32> to vector<32xf32>
    %43 = vector.shape_cast %42 : vector<32xf32> to vector<32x1xf32>
    %44 = vector.extract_strided_slice %10 {offsets = [0, 4], sizes = [32, 1], strides = [1, 1]} : vector<32x8xf32> to vector<32x1xf32>
    %45 = arith.addf %44, %43 : vector<32x1xf32>
    %46 = math.tanh %45 : vector<32x1xf32>
    %47 = vector.broadcast %46 : vector<32x1xf32> to vector<32x32xf32>
    %48 = arith.mulf %3, %47 : vector<32x32xf32>
    %cst_14 = arith.constant dense<0.000000e+00> : vector<32xf32>
    %49 = vector.multi_reduction <add>, %48, %cst_14 [0] : vector<32x32xf32> to vector<32xf32>
    %50 = vector.shape_cast %49 : vector<32xf32> to vector<1x32xf32>
    %51 = vector.extract_strided_slice %9 {offsets = [5, 0], sizes = [1, 32], strides = [1, 1]} : vector<8x32xf32> to vector<1x32xf32>
    %52 = arith.addf %51, %50 : vector<1x32xf32>
    %53 = math.tanh %52 : vector<1x32xf32>
    %54 = vector.broadcast %53 : vector<1x32xf32> to vector<32x32xf32>
    %55 = arith.mulf %2, %54 : vector<32x32xf32>
    %cst_15 = arith.constant dense<0.000000e+00> : vector<32xf32>
    %56 = vector.multi_reduction <add>, %55, %cst_15 [1] : vector<32x32xf32> to vector<32xf32>
    %57 = vector.shape_cast %56 : vector<32xf32> to vector<32x1xf32>
    %58 = vector.extract_strided_slice %10 {offsets = [0, 6], sizes = [32, 1], strides = [1, 1]} : vector<32x8xf32> to vector<32x1xf32>
    %59 = arith.addf %58, %57 : vector<32x1xf32>
    %60 = math.tanh %59 : vector<32x1xf32>
    %61 = vector.broadcast %60 : vector<32x1xf32> to vector<32x32xf32>
    %62 = arith.mulf %3, %61 : vector<32x32xf32>
    %cst_16 = arith.constant dense<0.000000e+00> : vector<32xf32>
    %63 = vector.multi_reduction <add>, %62, %cst_16 [0] : vector<32x32xf32> to vector<32xf32>
    %64 = vector.shape_cast %63 : vector<32xf32> to vector<1x32xf32>
    %65 = vector.extract_strided_slice %9 {offsets = [7, 0], sizes = [1, 32], strides = [1, 1]} : vector<8x32xf32> to vector<1x32xf32>
    %66 = arith.addf %65, %64 : vector<1x32xf32>
    %67 = math.tanh %66 : vector<1x32xf32>
    %cst_17 = arith.constant dense<0.000000e+00> : vector<1x8xf32>
    %68 = tpu.matmul %67, %4, %cst_17 {dimension_numbers = #tpu.dot_dimension_numbers<[1], [0], [0], [1], [0, 0, 1, 1], [], []>} : vector<1x32xf32>, vector<32x8xf32>, vector<1x8xf32> -> vector<1x8xf32>
    %69 = arith.addf %68, %5 : vector<1x8xf32>
    %c0_18 = arith.constant 0 : index
    %c0_19 = arith.constant 0 : index
    %70 = vector.load %arg2[%c0_18, %c0_19] : memref<1x8xf32, #tpu.memory_space<vmem>>, vector<1x8xf32>
    tpu.vector_store %arg2[%c0_18, %c0_19], %69 {strides = array<i32>} : memref<1x8xf32, #tpu.memory_space<vmem>>, vector<1x8xf32>,
    return
  }
}

</mosaic_0001>

<llo_original>
// kernel: tpu_custom_call.1
$region0: #{tpu_custom_call.1}
  #allocation0 [shape = 'u32[]', space=smem, size = 0x4, offset = 0x4, fixed_abs, tag = 'smem constant byte address 0x4 - core index']
  #allocation1 [shape = 'u32[144,128]{1,0:T(1,128)}', space=vmem, size = 0x12000, scoped, tag = 'internal scratch']
  %s0 = inlined_call_operand.vmem [shape: f32[8,16], index: 0, kind: input, shape index: {}]
  %s1 = inlined_call_operand.vmem [shape: f32[128,32], index: 1, kind: input, shape index: {}]
  %s2 = inlined_call_operand.hbm [shape: f32[1,8], index: 2, kind: output, shape index: {}]
  %s3 = sld [smem:[#allocation0]]
  $region18: #{tpu_custom_call.1} parent=0
    _
  %s5 = ssub.s32 1, %s3
  %s6 = scalar_select 0, %s5, %s3
  $region1: #{tpu_custom_call.1} parent=0
    #allocation2 [shape = 'u8[512]{0}', space=vmem, size = 0x400, scoped, tag = 'output window, operand 0, single buffered']
    #allocation3 [shape = 's32[1]{0}', space=sflag, size = 0x4, scoped, tag = 'scoped memory for tpu_custom_call.1']
    %7 = vsyncpa [#allocation3], 0
    // Predicated region
    $region2: #{tpu_custom_call.1} parent=1 // pred_check
      _
    $region3: #{tpu_custom_call.1} parent=1 // pred_check_branch
      %9 = sbr.rel (0) target = $region5
    $region4: #{tpu_custom_call.1} parent=1 // pred_region
      _
    $region5: #{tpu_custom_call.1} parent=1 // pred_fallthru
      _
    // Predicated region
    $region6: #{tpu_custom_call.1} parent=1 // pred_check
      _
    $region7: #{tpu_custom_call.1} parent=1 // pred_check_branch
      %11 = sbr.rel (0) target = $region9
    $region8: #{tpu_custom_call.1} parent=1 // pred_region
      _
    $region9: #{tpu_custom_call.1} parent=1 // pred_fallthru
      _
    %v12 = vld [vmem:[%s1] sm:$0xff]
    %v13 = vld [vmem:[%s1 + $0x8] sm:$0xff]
    %v14 = vld [vmem:[%s1 + $0x10] sm:$0x1]
    %v15 = vld [vmem:[%s1 + $0x18] sm:$0xff]
    %v16 = vld [vmem:[%s1 + $0x20] sm:$0xff]
    %v17 = vld [vmem:[%s1 + $0x28] sm:$0xff]
    %v18 = vld [vmem:[%s1 + $0x30] sm:$0xff]
    %v19 = vld [vmem:[%s1 + $0x38] sm:$0xff]
    %v20 = vld [vmem:[%s1 + $0x40] sm:$0xff]
    %v21 = vld [vmem:[%s1 + $0x48] sm:$0xff]
    %v22 = vld [vmem:[%s1 + $0x50] sm:$0xff]
    %v23 = vld [vmem:[%s1 + $0x58] sm:$0xff]
    %v24 = vld [vmem:[%s1 + $0x60] sm:$0xff]
    %v25 = vld [vmem:[%s1 + $0x68] sm:$0xff]
    %v26 = vld [vmem:[%s1 + $0x70] sm:$0xff]
    %v27 = vld [vmem:[%s1 + $0x78] sm:$0x1]
    %v28 = vld [vmem:[%s0] sm:$0xff]
    %v29 = vlaneseq
    %v30 = vshrl.u32 %v29, 7
    %v31 = vsub.s32 0, %v30
    %v32 = vrot.slane %v14, %v31
    %vm33 = vcmask 130048
    %v35 = vsel %vm33, %v28, 0
    %37 = vmatprep.subr.mxu0 0.0
    %38 = vmatpush1.msra.mxu0 %v12
    %39 = vmatprep.subr.mxu0 0.0
    %40 = vmatpush1.msra.mxu0 %v13
    %41 = vmatprep.subr.mxu0 0.0
    %42 = vmatpush1.msra.mxu0 0.0
    %43 = vmatprep.subr.mxu0 0.0
    %44 = vmatpush1.msra.mxu0 0.0
    %45 = vmatprep.subr.mxu0 0.0
    %46 = vmatpush1.msra.mxu0 0.0
    %47 = vmatprep.subr.mxu0 0.0
    %48 = vmatpush1.msra.mxu0 0.0
    %49 = vmatprep.subr.mxu0 0.0
    %50 = vmatpush1.msra.mxu0 0.0
    %51 = vmatprep.subr.mxu0 0.0
    %52 = vmatpush1.msra.mxu0 0.0
    %53 = vmatprep.subr.mxu0 0.0
    %54 = vmatpush1.msra.mxu0 0.0
    %55 = vmatprep.subr.mxu0 0.0
    %56 = vmatpush1.msra.mxu0 0.0
    %57 = vmatprep.subr.mxu0 0.0
    %58 = vmatpush1.msra.mxu0 0.0
    %59 = vmatprep.subr.mxu0 0.0
    %60 = vmatpush1.msra.mxu0 0.0
    %61 = vmatprep.subr.mxu0 0.0
    %62 = vmatpush1.msra.mxu0 0.0
    %63 = vmatprep.subr.mxu0 0.0
    %64 = vmatpush1.msra.mxu0 0.0
    %65 = vmatprep.subr.mxu0 0.0
    %66 = vmatpush1.msra.mxu0 0.0
    %67 = vmatprep.subr.mxu0 0.0
    %68 = vmatpush1.msra.mxu0 0.0
    %69 = vmatprep.subr.mxu0 0.0
    %70 = vmatpush1.msra.mxu0 0.0
    %71 = vmatprep.subr.mxu0 0.0
    %72 = vmatpush1.msra.mxu0 0.0
    %73 = vmatprep.subr.mxu0 0.0
    %74 = vmatpush1.msra.mxu0 0.0
    %75 = vmatprep.subr.mxu0 0.0
    %76 = vmatpush1.msra.mxu0 0.0
    %77 = vmatprep.subr.mxu0 0.0
    %78 = vmatpush1.msra.mxu0 0.0
    %79 = vmatprep.subr.mxu0 0.0
    %80 = vmatpush1.msra.mxu0 0.0
    %81 = vmatprep.subr.mxu0 0.0
    %82 = vmatpush1.msra.mxu0 0.0
    %83 = vmatprep.subr.mxu0 0.0
    %84 = vmatpush1.msra.mxu0 0.0
    %85 = vmatprep.subr.mxu0 0.0
    %86 = vmatpush1.msra.mxu0 0.0
    %87 = vmatprep.subr.mxu0 0.0
    %88 = vmatpush1.msra.mxu0 0.0
    %89 = vmatprep.subr.mxu0 0.0
    %90 = vmatpush1.msra.mxu0 0.0
    %91 = vmatprep.subr.mxu0 0.0
    %92 = vmatpush1.msra.mxu0 0.0
    %93 = vmatprep.subr.mxu0 0.0
    %94 = vmatpush1.msra.mxu0 0.0
    %95 = vmatprep.subr.mxu0 0.0
    %96 = vmatpush1.msra.mxu0 0.0
    %97 = vmatprep.subr.mxu0 0.0
    %98 = vmatpush1.msra.mxu0 0.0
    %99 = vmatprep.subr.mxu0 0.0
    %100 = vmatpush1.msra.mxu0 0.0
    %101 = vmatprep.mubr.f32.mxu0 0.0
    %102 = vmatmul.mubr.f32.gmra.mrb[0].mxu0 %v35
    %v103 = vpop.f32.mrb[0].mxu0
    %v104 = vadd.f32 %v32, %v103
    %v105 = vpop.f32.mrb[0].mxu0
    %106 = vdwg.mxu0
    %107 = vxpose.xlu0.b32.start [1/16] %v104, 128
    %108 = vxpose.xlu0.b32.cont [2/16] 0.0, 128
    %109 = vxpose.xlu0.b32.cont [3/16] 0.0, 128
    %110 = vxpose.xlu0.b32.cont [4/16] 0.0, 128
    %111 = vxpose.xlu0.b32.cont [5/16] 0.0, 128
    %112 = vxpose.xlu0.b32.cont [6/16] 0.0, 128
    %113 = vxpose.xlu0.b32.cont [7/16] 0.0, 128
    %114 = vxpose.xlu0.b32.cont [8/16] 0.0, 128
    %115 = vxpose.xlu0.b32.cont [9/16] 0.0, 128
    %116 = vxpose.xlu0.b32.cont [10/16] 0.0, 128
    %117 = vxpose.xlu0.b32.cont [11/16] 0.0, 128
    %118 = vxpose.xlu0.b32.cont [12/16] 0.0, 128
    %119 = vxpose.xlu0.b32.cont [13/16] 0.0, 128
    %120 = vxpose.xlu0.b32.cont [14/16] 0.0, 128
    %121 = vxpose.xlu0.b32.cont [15/16] 0.0, 128
    %122 = vxpose.xlu0.b32.end [16/16] 0.0, 128
    %v123 = vpop.trf.xlu0
    %v124 = vpop.trf.xlu0
    %v125 = vpop.trf.xlu0
    %v126 = vpop.trf.xlu0
    %v127 = vpop.trf.xlu0
    %v128 = vpop.trf.xlu0
    %v129 = vpop.trf.xlu0
    %v130 = vpop.trf.xlu0
    %v131 = vpop.trf.xlu0
    %v132 = vpop.trf.xlu0
    %v133 = vpop.trf.xlu0
    %v134 = vpop.trf.xlu0
    %v135 = vpop.trf.xlu0
    %v136 = vpop.trf.xlu0
    %v137 = vpop.trf.xlu0
    %v138 = vpop.trf.xlu0
    %v139 = vmul.f32 %v15, 0.0
    %v140 = vmul.f32 %v16, 0.0
    %v141 = vmul.f32 %v17, 0.0
    %v142 = vmul.f32 %v18, 0.0
    %vm143 = vcmask 261120
    %v144 = vsel %vm143, %v139, 0.0
    %145 = vadd.xlane.f32.xlu0 %v144
    %v146 = vpop.xlane.xlu0 %145
    %v147 = vsel %vm143, %v140, 0.0
    %148 = vadd.xlane.f32.xlu0 %v147
    %v149 = vpop.xlane.xlu0 %148
    %v150 = vsel %vm143, %v141, 0.0
    %151 = vadd.xlane.f32.xlu0 %v150
    %v152 = vpop.xlane.xlu0 %151
    %v153 = vsel %vm143, %v142, 0.0
    %154 = vadd.xlane.f32.xlu0 %v153
    %v155 = vpop.xlane.xlu0 %154
    %v156 = vadd.f32 %v123, %v146
    %v157 = vadd.f32 %v124, %v149
    %v158 = vadd.f32 %v125, %v152
    %v159 = vadd.f32 %v126, %v155
    %v160 = vtanh.pop %v156
    %v161 = vtanh.pop %v157
    %v162 = vtanh.pop %v158
    %v163 = vtanh.pop %v159
    %165 = vset.pattern.permute.xlu0 0
    %166 = vperm.xlu0 %165, %v160
    %v167 = vpop.permute.xlu0 %166
    %170 = vset.pattern.permute.xlu0 0
    %171 = vperm.xlu0 %170, %v161
    %v172 = vpop.permute.xlu0 %171
    %175 = vset.pattern.permute.xlu0 0
    %176 = vperm.xlu0 %175, %v162
    %v177 = vpop.permute.xlu0 %176
    %180 = vset.pattern.permute.xlu0 0
    %181 = vperm.xlu0 %180, %v163
    %v182 = vpop.permute.xlu0 %181
    %v184 = vmul.f32 %v19, %v167
    %v185 = vmul.f32 %v20, %v172
    %v186 = vmul.f32 %v21, %v177
    %v187 = vmul.f32 %v22, %v182
    %v188 = vsel %vm143, %v184, 0.0
    %v189 = vsel %vm143, %v185, 0.0
    %v190 = vadd.f32 %v188, %v189
    %v191 = vsel %vm143, %v186, 0.0
    %v192 = vadd.f32 %v190, %v191
    %v193 = vsel %vm143, %v187, 0.0
    %v194 = vadd.f32 %v192, %v193
    %v195 = vrot.slane %v194, 4
    %v196 = vadd.f32 %v194, %v195
    %v197 = vrot.slane %v196, 2
    %v198 = vadd.f32 %v196, %v197
    %v199 = vrot.slane %v198, 1
    %v200 = vadd.f32 %v198, %v199
    %v201 = vadd.f32 %v104, %v200
    %v202 = vtanh.pop %v201
    %v203 = vlaneseq
    %v204 = vshrl.u32 %v203, 7
    %v205 = vsub.s32 1, %v204
    %v206 = vrot.slane %v202, %v205
    %v207 = vmul.f32 %v15, %v206
    %v208 = vmul.f32 %v16, %v206
    %v209 = vmul.f32 %v17, %v206
    %v210 = vmul.f32 %v18, %v206
    %v211 = vsel %vm143, %v207, 0.0
    %212 = vadd.xlane.f32.xlu0 %v211
    %v213 = vpop.xlane.xlu0 %212
    %v214 = vsel %vm143, %v208, 0.0
    %215 = vadd.xlane.f32.xlu0 %v214
    %v216 = vpop.xlane.xlu0 %215
    %v217 = vsel %vm143, %v209, 0.0
    %218 = vadd.xlane.f32.xlu0 %v217
    %v219 = vpop.xlane.xlu0 %218
    %v220 = vsel %vm143, %v210, 0.0
    %221 = vadd.xlane.f32.xlu0 %v220
    %v222 = vpop.xlane.xlu0 %221
    %v223 = vadd.f32 %v123, %v213
    %v224 = vadd.f32 %v124, %v216
    %v225 = vadd.f32 %v125, %v219
    %v226 = vadd.f32 %v126, %v222
    %v227 = vtanh.pop %v223
    %v228 = vtanh.pop %v224
    %v229 = vtanh.pop %v225
    %v230 = vtanh.pop %v226
    %232 = vset.pattern.permute.xlu0 2
    %233 = vperm.xlu0 %232, %v227
    %v234 = vpop.permute.xlu0 %233
    %237 = vset.pattern.permute.xlu0 2
    %238 = vperm.xlu0 %237, %v228
    %v239 = vpop.permute.xlu0 %238
    %242 = vset.pattern.permute.xlu0 2
    %243 = vperm.xlu0 %242, %v229
    %v244 = vpop.permute.xlu0 %243
    %247 = vset.pattern.permute.xlu0 2
    %248 = vperm.xlu0 %247, %v230
    %v249 = vpop.permute.xlu0 %248
    %v251 = vmul.f32 %v19, %v234
    %v252 = vmul.f32 %v20, %v239
    %v253 = vmul.f32 %v21, %v244
    %v254 = vmul.f32 %v22, %v249
    %v255 = vsel %vm143, %v251, 0.0
    %v256 = vsel %vm143, %v252, 0.0
    %v257 = vadd.f32 %v255, %v256
    %v258 = vsel %vm143, %v253, 0.0
    %v259 = vadd.f32 %v257, %v258
    %v260 = vsel %vm143, %v254, 0.0
    %v261 = vadd.f32 %v259, %v260
    %v262 = vrot.slane %v261, 4
    %v263 = vadd.f32 %v261, %v262
    %v264 = vrot.slane %v263, 2
    %v265 = vadd.f32 %v263, %v264
    %v266 = vrot.slane %v265, 1
    %v267 = vadd.f32 %v265, %v266
    %v268 = vadd.f32 %v104, %v267
    %v269 = vtanh.pop %v268
    %v270 = vlaneseq
    %v271 = vshrl.u32 %v270, 7
    %v272 = vsub.s32 3, %v271
    %v273 = vrot.slane %v269, %v272
    %v274 = vmul.f32 %v15, %v273
    %v275 = vmul.f32 %v16, %v273
    %v276 = vmul.f32 %v17, %v273
    %v277 = vmul.f32 %v18, %v273
    %v278 = vsel %vm143, %v274, 0.0
    %279 = vadd.xlane.f32.xlu0 %v278
    %v280 = vpop.xlane.xlu0 %279
    %v281 = vsel %vm143, %v275, 0.0
    %282 = vadd.xlane.f32.xlu0 %v281
    %v283 = vpop.xlane.xlu0 %282
    %v284 = vsel %vm143, %v276, 0.0
    %285 = vadd.xlane.f32.xlu0 %v284
    %v286 = vpop.xlane.xlu0 %285
    %v287 = vsel %vm143, %v277, 0.0
    %288 = vadd.xlane.f32.xlu0 %v287
    %v289 = vpop.xlane.xlu0 %288
    %v290 = vadd.f32 %v123, %v280
    %v291 = vadd.f32 %v124, %v283
    %v292 = vadd.f32 %v125, %v286
    %v293 = vadd.f32 %v126, %v289
    %v294 = vtanh.pop %v290
    %v295 = vtanh.pop %v291
    %v296 = vtanh.pop %v292
    %v297 = vtanh.pop %v293
    %299 = vset.pattern.permute.xlu0 4
    %300 = vperm.xlu0 %299, %v294
    %v301 = vpop.permute.xlu0 %300
    %304 = vset.pattern.permute.xlu0 4
    %305 = vperm.xlu0 %304, %v295
    %v306 = vpop.permute.xlu0 %305
    %309 = vset.pattern.permute.xlu0 4
    %310 = vperm.xlu0 %309, %v296
    %v311 = vpop.permute.xlu0 %310
    %314 = vset.pattern.permute.xlu0 4
    %315 = vperm.xlu0 %314, %v297
    %v316 = vpop.permute.xlu0 %315
    %v318 = vmul.f32 %v19, %v301
    %v319 = vmul.f32 %v20, %v306
    %v320 = vmul.f32 %v21, %v311
    %v321 = vmul.f32 %v22, %v316
    %v322 = vsel %vm143, %v318, 0.0
    %v323 = vsel %vm143, %v319, 0.0
    %v324 = vadd.f32 %v322, %v323
    %v325 = vsel %vm143, %v320, 0.0
    %v326 = vadd.f32 %v324, %v325
    %v327 = vsel %vm143, %v321, 0.0
    %v328 = vadd.f32 %v326, %v327
    %v329 = vrot.slane %v328, 4
    %v330 = vadd.f32 %v328, %v329
    %v331 = vrot.slane %v330, 2
    %v332 = vadd.f32 %v330, %v331
    %v333 = vrot.slane %v332, 1
    %v334 = vadd.f32 %v332, %v333
    %v335 = vadd.f32 %v104, %v334
    %v336 = vtanh.pop %v335
    %v337 = vlaneseq
    %v338 = vshrl.u32 %v337, 7
    %v339 = vsub.s32 5, %v338
    %v340 = vrot.slane %v336, %v339
    %v341 = vmul.f32 %v15, %v340
    %v342 = vmul.f32 %v16, %v340
    %v343 = vmul.f32 %v17, %v340
    %v344 = vmul.f32 %v18, %v340
    %v345 = vsel %vm143, %v341, 0.0
    %346 = vadd.xlane.f32.xlu0 %v345
    %v347 = vpop.xlane.xlu0 %346
    %v348 = vsel %vm143, %v342, 0.0
    %349 = vadd.xlane.f32.xlu0 %v348
    %v350 = vpop.xlane.xlu0 %349
    %v351 = vsel %vm143, %v343, 0.0
    %352 = vadd.xlane.f32.xlu0 %v351
    %v353 = vpop.xlane.xlu0 %352
    %v354 = vsel %vm143, %v344, 0.0
    %355 = vadd.xlane.f32.xlu0 %v354
    %v356 = vpop.xlane.xlu0 %355
    %v357 = vadd.f32 %v123, %v347
    %v358 = vadd.f32 %v124, %v350
    %v359 = vadd.f32 %v125, %v353
    %v360 = vadd.f32 %v126, %v356
    %v361 = vtanh.pop %v357
    %v362 = vtanh.pop %v358
    %v363 = vtanh.pop %v359
    %v364 = vtanh.pop %v360
    %366 = vset.pattern.permute.xlu0 6
    %367 = vperm.xlu0 %366, %v361
    %v368 = vpop.permute.xlu0 %367
    %371 = vset.pattern.permute.xlu0 6
    %372 = vperm.xlu0 %371, %v362
    %v373 = vpop.permute.xlu0 %372
    %376 = vset.pattern.permute.xlu0 6
    %377 = vperm.xlu0 %376, %v363
    %v378 = vpop.permute.xlu0 %377
    %381 = vset.pattern.permute.xlu0 6
    %382 = vperm.xlu0 %381, %v364
    %v383 = vpop.permute.xlu0 %382
    %v385 = vmul.f32 %v19, %v368
    %v386 = vmul.f32 %v20, %v373
    %v387 = vmul.f32 %v21, %v378
    %v388 = vmul.f32 %v22, %v383
    %v389 = vsel %vm143, %v385, 0.0
    %v390 = vsel %vm143, %v386, 0.0
    %v391 = vadd.f32 %v389, %v390
    %v392 = vsel %vm143, %v387, 0.0
    %v393 = vadd.f32 %v391, %v392
    %v394 = vsel %vm143, %v388, 0.0
    %v395 = vadd.f32 %v393, %v394
    %v396 = vrot.slane %v395, 4
    %v397 = vadd.f32 %v395, %v396
    %v398 = vrot.slane %v397, 2
    %v399 = vadd.f32 %v397, %v398
    %v400 = vrot.slane %v399, 1
    %v401 = vadd.f32 %v399, %v400
    %v402 = vadd.f32 %v104, %v401
    %v403 = vtanh.pop %v402
    %v405 = vrot.slane %v403, 7
    %v406 = vsel %vm143, %v405, 0
    %408 = vmatprep.subr.mxu0 0.0
    %409 = vmatpush1.msra.mxu0 %v23
    %410 = vmatprep.subr.mxu0 0.0
    %411 = vmatpush1.msra.mxu0 %v24
    %412 = vmatprep.subr.mxu0 0.0
    %413 = vmatpush1.msra.mxu0 %v25
    %414 = vmatprep.subr.mxu0 0.0
    %415 = vmatpush1.msra.mxu0 %v26
    %416 = vmatprep.subr.mxu0 0.0
    %417 = vmatpush1.msra.mxu0 0.0
    %418 = vmatprep.subr.mxu0 0.0
    %419 = vmatpush1.msra.mxu0 0.0
    %420 = vmatprep.subr.mxu0 0.0
    %421 = vmatpush1.msra.mxu0 0.0
    %422 = vmatprep.subr.mxu0 0.0
    %423 = vmatpush1.msra.mxu0 0.0
    %424 = vmatprep.subr.mxu0 0.0
    %425 = vmatpush1.msra.mxu0 0.0
    %426 = vmatprep.subr.mxu0 0.0
    %427 = vmatpush1.msra.mxu0 0.0
    %428 = vmatprep.subr.mxu0 0.0
    %429 = vmatpush1.msra.mxu0 0.0
    %430 = vmatprep.subr.mxu0 0.0
    %431 = vmatpush1.msra.mxu0 0.0
    %432 = vmatprep.subr.mxu0 0.0
    %433 = vmatpush1.msra.mxu0 0.0
    %434 = vmatprep.subr.mxu0 0.0
    %435 = vmatpush1.msra.mxu0 0.0
    %436 = vmatprep.subr.mxu0 0.0
    %437 = vmatpush1.msra.mxu0 0.0
    %438 = vmatprep.subr.mxu0 0.0
    %439 = vmatpush1.msra.mxu0 0.0
    %440 = vmatprep.subr.mxu0 0.0
    %441 = vmatpush1.msra.mxu0 0.0
    %442 = vmatprep.subr.mxu0 0.0
    %443 = vmatpush1.msra.mxu0 0.0
    %444 = vmatprep.subr.mxu0 0.0
    %445 = vmatpush1.msra.mxu0 0.0
    %446 = vmatprep.subr.mxu0 0.0
    %447 = vmatpush1.msra.mxu0 0.0
    %448 = vmatprep.subr.mxu0 0.0
    %449 = vmatpush1.msra.mxu0 0.0
    %450 = vmatprep.subr.mxu0 0.0
    %451 = vmatpush1.msra.mxu0 0.0
    %452 = vmatprep.subr.mxu0 0.0
    %453 = vmatpush1.msra.mxu0 0.0
    %454 = vmatprep.subr.mxu0 0.0
    %455 = vmatpush1.msra.mxu0 0.0
    %456 = vmatprep.subr.mxu0 0.0
    %457 = vmatpush1.msra.mxu0 0.0
    %458 = vmatprep.subr.mxu0 0.0
    %459 = vmatpush1.msra.mxu0 0.0
    %460 = vmatprep.subr.mxu0 0.0
    %461 = vmatpush1.msra.mxu0 0.0
    %462 = vmatprep.subr.mxu0 0.0
    %463 = vmatpush1.msra.mxu0 0.0
    %464 = vmatprep.subr.mxu0 0.0
    %465 = vmatpush1.msra.mxu0 0.0
    %466 = vmatprep.subr.mxu0 0.0
    %467 = vmatpush1.msra.mxu0 0.0
    %468 = vmatprep.subr.mxu0 0.0
    %469 = vmatpush1.msra.mxu0 0.0
    %470 = vmatprep.subr.mxu0 0.0
    %471 = vmatpush1.msra.mxu0 0.0
    %472 = vmatprep.mubr.f32.mxu0 0.0
    %473 = vmatmul.mubr.f32.gmra.mrb[0].mxu0 %v406
    %v474 = vpop.f32.mrb[0].mxu0
    %v475 = vadd.f32 %v27, %v474
    %v476 = vpop.f32.mrb[0].mxu0
    %477 = vdwg.mxu0
    %vm478 = vcmask 57344
    %479 = vst.msk [vmem:[#allocation2] sm:$0x1] %vm478, %v475
    // Predicated region
    $region10: #{tpu_custom_call.1} parent=1 // pred_check
      _
    $region11: #{tpu_custom_call.1} parent=1 // pred_check_branch
      %481 = sbr.rel (0) target = $region13
    $region12: #{tpu_custom_call.1} parent=1 // pred_region
      %s483 = ssub.s32 16, 16
      %484 = vsyncadd [#allocation3], %s483
      %s486 = sshll.u32 [#allocation2], 4
      %s487 = int_to_ptr.vmem [resolvable:$true] %s486
      %489 = dma.vmem_to_hbm [thread:$0]  %s487, 16, %s2, [#allocation3]
    $region13: #{tpu_custom_call.1} parent=1 // pred_fallthru
      _
    // Predicated region
    $region14: #{tpu_custom_call.1} parent=1 // pred_check
      _
    $region15: #{tpu_custom_call.1} parent=1 // pred_check_branch
      %491 = sbr.rel (0) target = $region17
    $region16: #{tpu_custom_call.1} parent=1 // pred_region
      %492 = dma.done [#allocation3], 16
    $region17: #{tpu_custom_call.1} parent=1 // pred_fallthru
      _
    %493 = vsyncpa [#allocation3], 1

</llo_original>
